<compile_context>
chip_gen: v7x
topology: tpu7x:2x2x1
jax: 0.10.0
libtpu: 0.0.40
codegen_flags: <defaults>
</compile_context>

<pallas_src>
import math
import functools

import jax
import jax.numpy as jnp
from jax.experimental import pallas as pl
from jax.experimental.pallas import tpu as pltpu


# ----------------------------------------------------------------------------
# Kernel: one projection GEMM + bias per (sample, column-tile) grid step.
# ----------------------------------------------------------------------------
def _proj_kernel(p_ref, w_ref, b_ref, o_ref):
    """p_ref : (1, CKK, TN)  bf16  im2col patch columns for TN output pixels
       w_ref : (E, CKK)      bf16  flattened conv weight (constant block)
       b_ref : (E, 1)        f32   conv bias             (constant block)
       o_ref : (1, E, TN)          NCHW output tile (H*W flattened, lane-dense)
    """
    acc = jnp.dot(w_ref[...], p_ref[0],
                  preferred_element_type=jnp.float32)          # (E, TN) on MXU
    # Single lane-dense store per grid step; accumulation stays in registers,
    # so no VMEM scratch accumulator is needed.
    o_ref[0] = (acc + b_ref[...]).astype(o_ref.dtype)


# ----------------------------------------------------------------------------
# Wrapper-side im2col (pure data movement; one fused XLA transpose for K==S).
# ----------------------------------------------------------------------------
def _im2col(x, K, S, Ho, Wo):
    """(N, C, Hp, Wp) -> (N, C*K*K, Ho*Wo) with rows ordered (c, ki, kj) and
    columns ordered (t, j), matching w.reshape(E, C*K*K)."""
    N, C, Hp, Wp = x.shape
    if K == S and Hp == Ho * S and Wp == Wo * S:
        # Non-overlapping patches (default PatchEmbed config): every element
        # moves exactly once.
        x6 = x.reshape(N, C, Ho, S, Wo, S)
        return x6.transpose(0, 1, 3, 5, 2, 4).reshape(N, C * K * K, Ho * Wo)
    # General (overlapping kernel) case: K*K strided slices.
    cols = []
    for ki in range(K):
        for kj in range(K):
            cols.append(x[:, :, ki:ki + S * (Ho - 1) + 1:S,
                              kj:kj + S * (Wo - 1) + 1:S])
    p = jnp.stack(cols, axis=2)                    # (N, C, K*K, Ho, Wo)
    return p.reshape(N, C * K * K, Ho * Wo)


# ----------------------------------------------------------------------------
# Public forward.
# ----------------------------------------------------------------------------
@functools.partial(jax.jit, static_argnames=("patch_size", "col_tile"))
def patch_embed(x, w, b, *, patch_size, col_tile=512):
    """PatchEmbed forward: x (N,C,H,W), w (E,C,K,K), b (E,) -> (N,E,Ho,Wo)."""
    N, C, H, W = x.shape
    E, Cw, K, K2 = w.shape
    assert Cw == C and K2 == K
    S = patch_size
    pad = (K - S + 1) // 2
    compute_dtype = jnp.bfloat16                   # bf16 MXU operands (review)

    xc = x.astype(compute_dtype)
    # Reflect padding (PyTorch padding_mode='reflect'); zero for the default
    # kernel_size == patch_size configuration.
    if pad > 0:
        xc = jnp.pad(xc, ((0, 0), (0, 0), (pad, pad), (pad, pad)),
                     mode="reflect")
    Hp, Wp = H + 2 * pad, W + 2 * pad
    Ho = (Hp - K) // S + 1
    Wo = (Wp - K) // S + 1
    L = Ho * Wo
    CKK = C * K * K

    patches = _im2col(xc, K, S, Ho, Wo)            # (N, CKK, L), bf16

    # Column tile: lane-dense (multiple of 256 for v6e / 128 for v5e) for real
    # images, and small enough that per-step VMEM stays ~hundreds of KB
    # regardless of image size (v7x 64 MiB VMEM safe).
    TN = col_tile if L >= col_tile else L
    L_pad = ((L + TN - 1) // TN) * TN
    if L_pad != L:
        patches = jnp.pad(patches, ((0, 0), (0, 0), (0, L_pad - L)))

    wflat = w.reshape(E, CKK).astype(compute_dtype)        # tiny (~10 KB)
    b2 = b.reshape(E, 1).astype(jnp.float32)

    out_dtype = x.dtype
    cost = pl.CostEstimate(
        flops=2 * N * E * CKK * L_pad,
        transcendentals=0,
        bytes_accessed=(N * CKK * L_pad * 2            # patches read (bf16)
                        + E * CKK * 2 + E * 4          # weight + bias
                        + N * E * L_pad * jnp.dtype(out_dtype).itemsize))

    out = pl.pallas_call(
        _proj_kernel,
        out_shape=jax.ShapeDtypeStruct((N, E, L_pad), out_dtype),
        grid=(N, L_pad // TN),
        in_specs=[
            pl.BlockSpec((1, CKK, TN), lambda n, j: (n, 0, j)),
            pl.BlockSpec((E, CKK), lambda n, j: (0, 0)),   # invariant, ~9 KB
            pl.BlockSpec((E, 1), lambda n, j: (0, 0)),     # invariant, tiny
        ],
        out_specs=pl.BlockSpec((1, E, TN), lambda n, j: (n, 0, j)),
        compiler_params=pltpu.CompilerParams(
            dimension_semantics=("parallel", "parallel"),
            vmem_limit_bytes=48 * 1024 * 1024),
        cost_estimate=cost,
    )(patches, wflat, b2)

    if L_pad != L:
        out = out[:, :, :L]
    # Metadata-only reshape back to the PyTorch NCHW output layout.
    return out.reshape(N, E, Ho, Wo)


# ----------------------------------------------------------------------------
# Pure-JAX reference + test harness.
# ----------------------------------------------------------------------------
def _reference(x, w, b, patch_size):
    """Reference of the PyTorch forward (reflect pad + strided conv)."""
    K = w.shape[2]
    S = patch_size
    pad = (K - S + 1) // 2
    if pad > 0:
        x = jnp.pad(x, ((0, 0), (0, 0), (pad, pad), (pad, pad)), mode="reflect")
    y = jax.lax.conv_general_dilated(
        x, w, window_strides=(S, S), padding="VALID",
        dimension_numbers=("NCHW", "OIHW", "NCHW"))
    return y + b.reshape(1, -1, 1, 1)


def _bf16_exact(a):
    # Round test data to bf16-representable values so the check is independent
    # of the (intended) bf16 matmul operand precision.
    return a.astype(jnp.bfloat16).astype(jnp.float32)


if __name__ == "__main__":
    N, Cin, H, W = 2, 3, 16, 16
    P, E = 4, 96                      # patch_size=4, embed_dim=96 (spec defaults)

    key = jax.random.PRNGKey(0)
    kx, kw1, kb, kw2 = jax.random.split(key, 4)

    x = _bf16_exact(jax.random.normal(kx, (N, Cin, H, W), jnp.float32))

    # Config 1: default kernel_size == patch_size (no padding).
    bound1 = 1.0 / math.sqrt(Cin * P * P)
    w1 = _bf16_exact(jax.random.uniform(kw1, (E, Cin, P, P), jnp.float32,
                                        -bound1, bound1))
    b1 = _bf16_exact(jax.random.uniform(kb, (E,), jnp.float32, -bound1, bound1))

    out1 = jax.block_until_ready(patch_embed(x, w1, b1, patch_size=P))
    ref1 = _reference(x, w1, b1, P)
    assert out1.shape == (N, E, H // P, W // P)
    assert jnp.allclose(out1, ref1, atol=1e-4, rtol=1e-4), "mismatch (K==P)"

    # Config 2: overlapping kernel_size=5 -> reflect padding path.
    Kk = 5
    bound2 = 1.0 / math.sqrt(Cin * Kk * Kk)
    w2 = _bf16_exact(jax.random.uniform(kw2, (E, Cin, Kk, Kk), jnp.float32,
                                        -bound2, bound2))
    out2 = jax.block_until_ready(patch_embed(x, w2, b1, patch_size=P))
    ref2 = _reference(x, w2, b1, P)
    assert out2.shape == ref2.shape
    assert jnp.allclose(out2, ref2, atol=1e-4, rtol=1e-4), "mismatch (K=5, reflect)"

    print("KERNEL_OK")
</pallas_src>

<mosaic_0001>
module attributes {stable_mosaic.version = 11 : i64} {
  func.func @_proj_kernel(%arg0: i32, %arg1: i32, %arg2: memref<1x48x16xbf16, #tpu.memory_space<vmem>>, %arg3: memref<96x48xbf16, #tpu.memory_space<vmem>>, %arg4: memref<96x1xf32, #tpu.memory_space<vmem>>, %arg5: memref<1x96x16xf32, #tpu.memory_space<vmem>>) attributes {dimension_semantics = [#tpu.dimension_semantics<parallel>, #tpu.dimension_semantics<parallel>], iteration_bounds = array<i64: 2, 1>, scalar_prefetch = 0 : i64, scratch_operands = 0 : i64, tpu.core_type = #tpu.core_type<tc>, window_params = [{transform_indices = @transform_0, window_bounds = array<i64: 1, 48, 16>}, {pipeline_mode = #tpu.pipeline_mode<synchronous>, transform_indices = @transform_1, window_bounds = array<i64: 96, 48>}, {pipeline_mode = #tpu.pipeline_mode<synchronous>, transform_indices = @transform_2, window_bounds = array<i64: 96, 1>}, {transform_indices = @transform_3, window_bounds = array<i64: 1, 96, 16>}]} {
    %c0 = arith.constant 0 : index
    %c0_0 = arith.constant 0 : index
    %0 = vector.load %arg3[%c0, %c0_0] : memref<96x48xbf16, #tpu.memory_space<vmem>>, vector<96x48xbf16>
    %c0_1 = arith.constant 0 : index
    %c0_2 = arith.constant 0 : index
    %c0_3 = arith.constant 0 : index
    %1 = vector.load %arg2[%c0_1, %c0_2, %c0_3] : memref<1x48x16xbf16, #tpu.memory_space<vmem>>, vector<1x48x16xbf16>
    %2 = vector.shape_cast %1 : vector<1x48x16xbf16> to vector<48x16xbf16>
    %cst = arith.constant dense<0.000000e+00> : vector<96x16xf32>
    %3 = tpu.matmul %0, %2, %cst {dimension_numbers = #tpu.dot_dimension_numbers<[1], [0], [0], [1], [0, 0, 1, 1], [], []>} : vector<96x48xbf16>, vector<48x16xbf16>, vector<96x16xf32> -> vector<96x16xf32>
    %c0_4 = arith.constant 0 : index
    %c0_5 = arith.constant 0 : index
    %4 = vector.load %arg4[%c0_4, %c0_5] : memref<96x1xf32, #tpu.memory_space<vmem>>, vector<96x1xf32>
    %5 = vector.broadcast %4 : vector<96x1xf32> to vector<96x16xf32>
    %6 = arith.addf %3, %5 : vector<96x16xf32>
    %c0_6 = arith.constant 0 : index
    %c0_7 = arith.constant 0 : index
    %c0_8 = arith.constant 0 : index
    %7 = vector.load %arg5[%c0_6, %c0_7, %c0_8] : memref<1x96x16xf32, #tpu.memory_space<vmem>>, vector<1x96x16xf32>
    %8 = vector.shape_cast %7 : vector<1x96x16xf32> to vector<96x16xf32>
    %9 = vector.shape_cast %6 : vector<96x16xf32> to vector<1x96x16xf32>
    tpu.vector_store %arg5[%c0_6, %c0_7, %c0_8], %9 {strides = array<i32>} : memref<1x96x16xf32, #tpu.memory_space<vmem>>, vector<1x96x16xf32>,
    return
  }
  func.func @transform_0(%arg0: i32, %arg1: i32) -> (i32, i32, i32) {
    %c0_i32 = arith.constant 0 : i32
    %c0_i32_0 = arith.constant 0 : i32
    return %arg0, %c0_i32, %arg1 : i32, i32, i32
  }
  func.func @transform_1(%arg0: i32, %arg1: i32) -> (i32, i32) {
    %c0_i32 = arith.constant 0 : i32
    %c0_i32_0 = arith.constant 0 : i32
    %c0_i32_1 = arith.constant 0 : i32
    return %c0_i32, %c0_i32_0 : i32, i32
  }
  func.func @transform_2(%arg0: i32, %arg1: i32) -> (i32, i32) {
    %c0_i32 = arith.constant 0 : i32
    %c0_i32_0 = arith.constant 0 : i32
    %c0_i32_1 = arith.constant 0 : i32
    return %c0_i32, %c0_i32_0 : i32, i32
  }
  func.func @transform_3(%arg0: i32, %arg1: i32) -> (i32, i32, i32) {
    %c0_i32 = arith.constant 0 : i32
    %c0_i32_0 = arith.constant 0 : i32
    return %arg0, %c0_i32, %arg1 : i32, i32, i32
  }
}

</mosaic_0001>

<llo_original>
// kernel: patch_embed.1
$region0: #{patch_embed.1}
  #allocation0 [shape = 'u32[]', space=smem, size = 0x4, offset = 0x4, fixed_abs, tag = 'smem constant byte address 0x4 - core index']
  #allocation1 [shape = 'u32[144,128]{1,0:T(1,128)}', space=vmem, size = 0x12000, scoped, tag = 'internal scratch']
  %s0 = inlined_call_operand.vmem [shape: bf16[2,48,16], index: 0, kind: input, shape index: {}]
  %s1 = inlined_call_operand.vmem [shape: bf16[96,48], index: 1, kind: input, shape index: {}]
  %s2 = inlined_call_operand.vmem [shape: f32[96,1], index: 2, kind: input, shape index: {}]
  %s3 = inlined_call_operand.vmem [shape: f32[2,96,16], index: 3, kind: output, shape index: {}]
  %s4 = sld [smem:[#allocation0]]
  $region45: #{patch_embed.1} parent=0
    _
  %s6 = ssub.s32 1, %s4
  %s7 = scalar_select 0, %s6, %s4
  loop: start=0, step=1, limit=4
  $region2: #{patch_embed.1} parent=0 // loop_pre_header
    _
  $region3: #{patch_embed.1} parent=0 // loop_header
    %s9 = sphi 0, %s13
    %p10 = scmp.ge.s32.totalorder %s9, 4
    %s16 = sphi 0, %s28
    %s17 = sphi 0, %s24
    %s18 = sphi 0, %s16
    %s19 = sphi 0, %s17
    %s20 = sphi 0, %s18
    %s21 = sphi 0, %s19
    %s33 = sphi 0, %s35
    %s36 = sphi 0, %s33
    %s37 = sphi 0, %s36
    %s53 = sphi 0, %s37
    %s57 = sphi 0, %s57
    %s59 = sphi 0, %s57
    %s60 = sphi 0, %s59
    %s74 = sphi 0, %s60
    %s78 = sphi 0, %s78
    %s80 = sphi 0, %s78
    %s81 = sphi 0, %s80
    %s95 = sphi 0, %s81
    %s103 = sphi 0, %s105
    %s106 = sphi 0, %s103
    %s107 = sphi 0, %s106
    %s123 = sphi 0, %s107
  $region4: #{patch_embed.1} parent=0 // loop_header_branch
    %12 = sbr.rel (%p10) target = $region8
  $region5: #{patch_embed.1} parent=0 // loop_body
    %s14 = ssub.s32 %s9, 1
    %s15 = ssub.s32 %s9, 2
    %s22 = sadd.s32 1, %s17
    %p23 = scmp.ge.s32.totalorder %s22, 1
    %s24 = scalar_select %p23, 0, %s22
    %s25 = sadd.s32 1, %s16
    %s26 = scalar_select %p23, %s25, %s16
    %p27 = scmp.ge.s32.totalorder %s26, 2
    %s28 = scalar_select %p27, 0, %s26
    %s29 = ssub.s32 %s16, %s28
    %s30 = ssub.s32 %s17, %s24
    %s31 = sor.u32 %s29, %s30
    %p32 = scmp.eq.s32.totalorder %s31, 0
    %s34 = sadd.s32 %s33, 1
    %s35 = scalar_select %p32, %s33, %s34
    %p38 = pneg %p32
    %p39 = scmp.eq.s32.totalorder %s9, 1
    %p40 = por %p38, %p39
    %p41 = scmp.ne.s32.totalorder %s33, %s36
    %p42 = scmp.eq.s32.totalorder %s9, 0
    %p43 = por %p41, %p42
    %p44 = scmp.ne.s32.totalorder %s33, %s36
    %p45 = scmp.eq.s32.totalorder %s14, 1
    %p46 = por %p44, %p45
    %p47 = scmp.ne.s32.totalorder %s36, %s37
    %p48 = scmp.eq.s32.totalorder %s14, 0
    %p49 = por %p47, %p48
    %p50 = scmp.ne.s32.totalorder %s36, %s37
    %p51 = scmp.eq.s32.totalorder %s15, 1
    %p52 = por %p50, %p51
    %p54 = scmp.ne.s32.totalorder %s37, %s53
    %p55 = scmp.eq.s32.totalorder %s15, 0
    %p56 = por %p54, %p55
    %s58 = sadd.s32 %s57, 1
    %p61 = scmp.eq.s32.totalorder %s9, 1
    %p62 = scmp.ne.s32.totalorder %s57, %s59
    %p63 = scmp.eq.s32.totalorder %s9, 0
    %p64 = por %p62, %p63
    %p65 = scmp.ne.s32.totalorder %s57, %s59
    %p66 = scmp.eq.s32.totalorder %s14, 1
    %p67 = por %p65, %p66
    %p68 = scmp.ne.s32.totalorder %s59, %s60
    %p69 = scmp.eq.s32.totalorder %s14, 0
    %p70 = por %p68, %p69
    %p71 = scmp.ne.s32.totalorder %s59, %s60
    %p72 = scmp.eq.s32.totalorder %s15, 1
    %p73 = por %p71, %p72
    %p75 = scmp.ne.s32.totalorder %s60, %s74
    %p76 = scmp.eq.s32.totalorder %s15, 0
    %p77 = por %p75, %p76
    %s79 = sadd.s32 %s78, 1
    %p82 = scmp.eq.s32.totalorder %s9, 1
    %p83 = scmp.ne.s32.totalorder %s78, %s80
    %p84 = scmp.eq.s32.totalorder %s9, 0
    %p85 = por %p83, %p84
    %p86 = scmp.ne.s32.totalorder %s78, %s80
    %p87 = scmp.eq.s32.totalorder %s14, 1
    %p88 = por %p86, %p87
    %p89 = scmp.ne.s32.totalorder %s80, %s81
    %p90 = scmp.eq.s32.totalorder %s14, 0
    %p91 = por %p89, %p90
    %p92 = scmp.ne.s32.totalorder %s80, %s81
    %p93 = scmp.eq.s32.totalorder %s15, 1
    %p94 = por %p92, %p93
    %p96 = scmp.ne.s32.totalorder %s81, %s95
    %p97 = scmp.eq.s32.totalorder %s15, 0
    %p98 = por %p96, %p97
    %s99 = ssub.s32 %s16, %s28
    %s100 = ssub.s32 %s17, %s24
    %s101 = sor.u32 %s99, %s100
    %p102 = scmp.eq.s32.totalorder %s101, 0
    %s104 = sadd.s32 %s103, 1
    %s105 = scalar_select %p102, %s103, %s104
    %p108 = pneg %p102
    %p109 = scmp.eq.s32.totalorder %s9, 1
    %p110 = por %p108, %p109
    %p111 = scmp.ne.s32.totalorder %s103, %s106
    %p112 = scmp.eq.s32.totalorder %s9, 0
    %p113 = por %p111, %p112
    %p114 = scmp.ne.s32.totalorder %s103, %s106
    %p115 = scmp.eq.s32.totalorder %s14, 1
    %p116 = por %p114, %p115
    %p117 = scmp.ne.s32.totalorder %s106, %s107
    %p118 = scmp.eq.s32.totalorder %s14, 0
    %p119 = por %p117, %p118
    %p120 = scmp.ne.s32.totalorder %s106, %s107
    %p121 = scmp.eq.s32.totalorder %s15, 1
    %p122 = por %p120, %p121
    %p124 = scmp.ne.s32.totalorder %s107, %s123
    %p125 = scmp.eq.s32.totalorder %s15, 0
    %p126 = por %p124, %p125
    %p127 = scmp.le.s32.totalorder 1, %s9
    %p128 = scmp.lt.s32.totalorder %s9, 3
    %p129 = pnand %p127, %p128
    %p130 = pneg %p129
    // Predicated region
    $region9: #{patch_embed.1} parent=5 // pred_check
      _
    $region10: #{patch_embed.1} parent=5 // pred_check_branch
      %132 = sbr.rel (%p129) target = $region12
    $region11: #{patch_embed.1} parent=5 // pred_region
      %s133 = ssub.s32 %s9, 1
      // Predicated region
      $region13: #{patch_embed.1} parent=11 // pred_check
        %p134 = pneg %p70
      $region14: #{patch_embed.1} parent=11 // pred_check_branch
        %136 = sbr.rel (%p134) target = $region16
      $region15: #{patch_embed.1} parent=11 // pred_region
        _
      $region16: #{patch_embed.1} parent=11 // pred_fallthru
        _
      // Predicated region
      $region17: #{patch_embed.1} parent=11 // pred_check
        %p137 = pneg %p91
      $region18: #{patch_embed.1} parent=11 // pred_check_branch
        %139 = sbr.rel (%p137) target = $region20
      $region19: #{patch_embed.1} parent=11 // pred_region
        _
      $region20: #{patch_embed.1} parent=11 // pred_fallthru
        _
    $region12: #{patch_embed.1} parent=5 // pred_fallthru
      _
    %p140 = scmp.lt.s32.totalorder %s9, 2
    // Predicated region
    $region21: #{patch_embed.1} parent=5 // pred_check
      %p141 = pneg %p140
    $region22: #{patch_embed.1} parent=5 // pred_check_branch
      %143 = sbr.rel (%p141) target = $region24
    $region23: #{patch_embed.1} parent=5 // pred_region
      // Predicated region
      $region25: #{patch_embed.1} parent=23 // pred_check
        %p144 = pneg %p43
      $region26: #{patch_embed.1} parent=23 // pred_check_branch
        %146 = sbr.rel (%p144) target = $region28
      $region27: #{patch_embed.1} parent=23 // pred_region
        %p147 = scmp.lt.s32.totalorder %s16, 1
        %s148 = scalar_select %p147, %s16, 1
        %p149 = scmp.lt.s32.totalorder %s17, 0
        %s150 = scalar_select %p149, %s17, 0
        %s151 = smul.addr %s148, 6
        %s152 = sadd.s32 %s150, %s151
        %s153 = smul.addr %s152, 4
        %s154 = scalar_lea.vmem %s0, %s153
      $region28: #{patch_embed.1} parent=23 // pred_fallthru
        _
    $region24: #{patch_embed.1} parent=5 // pred_fallthru
      _
    %p155 = scmp.le.s32.totalorder 1, %s9
    %p156 = scmp.lt.s32.totalorder %s9, 3
    %p157 = pnand %p155, %p156
    %p158 = pneg %p157
    // Predicated region
    $region29: #{patch_embed.1} parent=5 // pred_check
      _
    $region30: #{patch_embed.1} parent=5 // pred_check_branch
      %160 = sbr.rel (%p157) target = $region32
    $region31: #{patch_embed.1} parent=5 // pred_region
      %s161 = ssub.s32 %s9, 1
      %p162 = scmp.lt.s32.totalorder %s18, 1
      %s163 = scalar_select %p162, %s18, 1
      %p164 = scmp.lt.s32.totalorder %s19, 0
      %s165 = scalar_select %p164, %s19, 0
      %s166 = smul.addr %s163, 6
      %s167 = sadd.s32 %s165, %s166
      %s168 = smul.addr %s167, 4
      %s169 = scalar_lea.vmem %s0, %s168
      %p170 = pneg %p49
      %p171 = pneg %p46
      %p172 = pneg %p70
      %p173 = pneg %p67
      %p174 = pneg %p91
      %p175 = pneg %p88
      %p176 = pneg %p119
      %p177 = pneg %p116
      %p178 = scmp.lt.s32.totalorder %s18, 1
      %s179 = scalar_select %p178, %s18, 1
      %p180 = scmp.lt.s32.totalorder %s19, 0
      %s181 = scalar_select %p180, %s19, 0
      %s182 = smul.addr %s179, 12
      %s183 = sadd.s32 %s181, %s182
      %s184 = smul.addr %s183, 8
      %s185 = scalar_lea.vmem %s3, %s184
      %p186 = scmp.lt.s32.totalorder %s18, 1
      %s187 = scalar_select %p186, %s18, 1
      %p188 = scmp.lt.s32.totalorder %s19, 0
      %s189 = scalar_select %p188, %s19, 0
      %s190 = smul.addr %s187, 6
      %s191 = sadd.s32 %s189, %s190
      %s192 = smul.addr %s191, 4
      %s193 = scalar_lea.vmem %s0, %s192
      %p194 = scmp.lt.s32.totalorder %s18, 1
      %s195 = scalar_select %p194, %s18, 1
      %p196 = scmp.lt.s32.totalorder %s19, 0
      %s197 = scalar_select %p196, %s19, 0
      %s198 = smul.addr %s195, 12
      %s199 = sadd.s32 %s197, %s198
      %s200 = smul.addr %s199, 8
      %s201 = scalar_lea.vmem %s3, %s200
      %v203 = vld [vmem:[%s1] sm:$0xf]
      %v204 = vld [vmem:[%s1 + $0x4] sm:$0xf]
      %v205 = vld [vmem:[%s1 + $0x8] sm:$0xf]
      %v206 = vld [vmem:[%s1 + $0xc] sm:$0xf]
      %v207 = vld [vmem:[%s1 + $0x10] sm:$0xf]
      %v208 = vld [vmem:[%s1 + $0x14] sm:$0xf]
      %v209 = vld [vmem:[%s1 + $0x18] sm:$0xf]
      %v210 = vld [vmem:[%s1 + $0x1c] sm:$0xf]
      %v211 = vld [vmem:[%s1 + $0x20] sm:$0xf]
      %v212 = vld [vmem:[%s1 + $0x24] sm:$0xf]
      %v213 = vld [vmem:[%s1 + $0x28] sm:$0xf]
      %v214 = vld [vmem:[%s1 + $0x2c] sm:$0xf]
      %v215 = vld [vmem:[%s193] sm:$0xf]
      %v216 = vld [vmem:[%s193 + $0x4] sm:$0xf]
      %v217 = vld [vmem:[%s193 + $0x8] sm:$0xf]
      %v218 = vld [vmem:[%s193 + $0xc] sm:$0xf]
      %v219 = vld [vmem:[%s193 + $0x10] sm:$0xf]
      %v220 = vld [vmem:[%s193 + $0x14] sm:$0xf]
      %v221 = vld [vmem:[%s2] sm:$0xff]
      %v222 = vld [vmem:[%s2 + $0x8] sm:$0xff]
      %v223 = vld [vmem:[%s2 + $0x10] sm:$0xff]
      %v224 = vld [vmem:[%s2 + $0x18] sm:$0xff]
      %v225 = vld [vmem:[%s2 + $0x20] sm:$0xff]
      %v226 = vld [vmem:[%s2 + $0x28] sm:$0xff]
      %v227 = vld [vmem:[%s2 + $0x30] sm:$0xff]
      %v228 = vld [vmem:[%s2 + $0x38] sm:$0xff]
      %v229 = vld [vmem:[%s2 + $0x40] sm:$0xff]
      %v230 = vld [vmem:[%s2 + $0x48] sm:$0xff]
      %v231 = vld [vmem:[%s2 + $0x50] sm:$0xff]
      %v232 = vld [vmem:[%s2 + $0x58] sm:$0xff]
      %234 = vset.pattern.permute.xlu0 0
      %235 = vperm.xlu0 %234, %v221
      %v236 = vpop.permute.xlu0 %235
      %239 = vset.pattern.permute.xlu0 0
      %240 = vperm.xlu0 %239, %v222
      %v241 = vpop.permute.xlu0 %240
      %244 = vset.pattern.permute.xlu0 0
      %245 = vperm.xlu0 %244, %v223
      %v246 = vpop.permute.xlu0 %245
      %249 = vset.pattern.permute.xlu0 0
      %250 = vperm.xlu0 %249, %v224
      %v251 = vpop.permute.xlu0 %250
      %254 = vset.pattern.permute.xlu0 0
      %255 = vperm.xlu0 %254, %v225
      %v256 = vpop.permute.xlu0 %255
      %259 = vset.pattern.permute.xlu0 0
      %260 = vperm.xlu0 %259, %v226
      %v261 = vpop.permute.xlu0 %260
      %264 = vset.pattern.permute.xlu0 0
      %265 = vperm.xlu0 %264, %v227
      %v266 = vpop.permute.xlu0 %265
      %269 = vset.pattern.permute.xlu0 0
      %270 = vperm.xlu0 %269, %v228
      %v271 = vpop.permute.xlu0 %270
      %274 = vset.pattern.permute.xlu0 0
      %275 = vperm.xlu0 %274, %v229
      %v276 = vpop.permute.xlu0 %275
      %279 = vset.pattern.permute.xlu0 0
      %280 = vperm.xlu0 %279, %v230
      %v281 = vpop.permute.xlu0 %280
      %284 = vset.pattern.permute.xlu0 0
      %285 = vperm.xlu0 %284, %v231
      %v286 = vpop.permute.xlu0 %285
      %289 = vset.pattern.permute.xlu0 0
      %290 = vperm.xlu0 %289, %v232
      %v291 = vpop.permute.xlu0 %290
      %v305 = vunpack.c.l.b16 %v203
      %v306 = vunpack.c.l.b16 %v204
      %v307 = vunpack.c.l.b16 %v205
      %v308 = vunpack.c.l.b16 %v206
      %v309 = vunpack.c.l.b16 %v207
      %v310 = vunpack.c.l.b16 %v208
      %v311 = vunpack.c.l.b16 %v209
      %v312 = vunpack.c.l.b16 %v210
      %v313 = vunpack.c.l.b16 %v211
      %v314 = vunpack.c.l.b16 %v212
      %v315 = vunpack.c.l.b16 %v213
      %v316 = vunpack.c.l.b16 %v214
      %v317 = vpack.c.b16 %v306, %v305
      %v318 = vpack.c.b16 %v308, %v307
      %v319 = vpack.c.b16 %v310, %v309
      %v320 = vpack.c.b16 %v312, %v311
      %v321 = vpack.c.b16 %v314, %v313
      %v322 = vpack.c.b16 %v316, %v315
      %v329 = vunpack.c.l.b16 %v215
      %v330 = vunpack.c.l.b16 %v216
      %v331 = vunpack.c.l.b16 %v217
      %v332 = vunpack.c.l.b16 %v218
      %v333 = vunpack.c.l.b16 %v219
      %v334 = vunpack.c.l.b16 %v220
      %v335 = vpack.c.b16 %v330, %v329
      %v336 = vpack.c.b16 %v332, %v331
      %v337 = vpack.c.b16 %v334, %v333
      %vm341 = vcmask 392192
      %v343 = vsel %vm341, %v317, 0
      %v346 = vsel %vm341, %v318, 0
      %v349 = vsel %vm341, %v319, 0
      %v352 = vsel %vm341, %v320, 0
      %v355 = vsel %vm341, %v321, 0
      %v358 = vsel %vm341, %v322, 0
      %360 = vmatprep.subr.bf16.mxu0 0
      %361 = vmatpush1.bf16.msra.mxu0 %v335
      %362 = vmatprep.subr.bf16.mxu0 0
      %363 = vmatpush1.bf16.msra.mxu0 %v336
      %364 = vmatprep.subr.bf16.mxu0 0
      %365 = vmatpush1.bf16.msra.mxu0 %v337
      %366 = vmatprep.subr.bf16.mxu0 0
      %367 = vmatpush1.bf16.msra.mxu0 0
      %368 = vmatprep.subr.bf16.mxu0 0
      %369 = vmatpush1.bf16.msra.mxu0 0
      %370 = vmatprep.subr.bf16.mxu0 0
      %371 = vmatpush1.bf16.msra.mxu0 0
      %372 = vmatprep.subr.bf16.mxu0 0
      %373 = vmatpush1.bf16.msra.mxu0 0
      %374 = vmatprep.subr.bf16.mxu0 0
      %375 = vmatpush1.bf16.msra.mxu0 0
      %376 = vmatprep.subr.bf16.mxu0 0
      %377 = vmatpush1.bf16.msra.mxu0 0
      %378 = vmatprep.subr.bf16.mxu0 0
      %379 = vmatpush1.bf16.msra.mxu0 0
      %380 = vmatprep.subr.bf16.mxu0 0
      %381 = vmatpush1.bf16.msra.mxu0 0
      %382 = vmatprep.subr.bf16.mxu0 0
      %383 = vmatpush1.bf16.msra.mxu0 0
      %384 = vmatprep.subr.bf16.mxu0 0
      %385 = vmatpush1.bf16.msra.mxu0 0
      %386 = vmatprep.subr.bf16.mxu0 0
      %387 = vmatpush1.bf16.msra.mxu0 0
      %388 = vmatprep.subr.bf16.mxu0 0
      %389 = vmatpush1.bf16.msra.mxu0 0
      %390 = vmatprep.subr.bf16.mxu0 0
      %391 = vmatpush1.bf16.msra.mxu0 0
      %392 = vmatprep.mubr.bf16.mxu0 0
      %393 = vmatmul.mubr.bf16.gmra.mrb[0].mxu0 %v343
      %v394 = vpop.f32.mrb[0].mxu0
      %v395 = vadd.f32 %v236, %v394
      %v396 = vpop.f32.mrb[0].mxu0
      %v397 = vpop.f32.mrb[0].mxu0
      %v398 = vadd.f32 %v241, %v397
      %v399 = vpop.f32.mrb[0].mxu0
      %400 = vmatprep.mubr.bf16.mxu0 0
      %401 = vmatmul.mubr.bf16.gmra.mrb[0].mxu0 %v346
      %v402 = vpop.f32.mrb[0].mxu0
      %v403 = vadd.f32 %v246, %v402
      %v404 = vpop.f32.mrb[0].mxu0
      %v405 = vpop.f32.mrb[0].mxu0
      %v406 = vadd.f32 %v251, %v405
      %v407 = vpop.f32.mrb[0].mxu0
      %408 = vmatprep.mubr.bf16.mxu0 0
      %409 = vmatmul.mubr.bf16.gmra.mrb[0].mxu0 %v349
      %v410 = vpop.f32.mrb[0].mxu0
      %v411 = vadd.f32 %v256, %v410
      %v412 = vpop.f32.mrb[0].mxu0
      %v413 = vpop.f32.mrb[0].mxu0
      %v414 = vadd.f32 %v261, %v413
      %v415 = vpop.f32.mrb[0].mxu0
      %416 = vmatprep.mubr.bf16.mxu0 0
      %417 = vmatmul.mubr.bf16.gmra.mrb[0].mxu0 %v352
      %v418 = vpop.f32.mrb[0].mxu0
      %v419 = vadd.f32 %v266, %v418
      %v420 = vpop.f32.mrb[0].mxu0
      %v421 = vpop.f32.mrb[0].mxu0
      %v422 = vadd.f32 %v271, %v421
      %v423 = vpop.f32.mrb[0].mxu0
      %424 = vmatprep.mubr.bf16.mxu0 0
      %425 = vmatmul.mubr.bf16.gmra.mrb[0].mxu0 %v355
      %v426 = vpop.f32.mrb[0].mxu0
      %v427 = vadd.f32 %v276, %v426
      %v428 = vpop.f32.mrb[0].mxu0
      %v429 = vpop.f32.mrb[0].mxu0
      %v430 = vadd.f32 %v281, %v429
      %v431 = vpop.f32.mrb[0].mxu0
      %432 = vmatprep.mubr.bf16.mxu0 0
      %433 = vmatmul.mubr.bf16.gmra.mrb[0].mxu0 %v358
      %v434 = vpop.f32.mrb[0].mxu0
      %v435 = vadd.f32 %v286, %v434
      %v436 = vpop.f32.mrb[0].mxu0
      %v437 = vpop.f32.mrb[0].mxu0
      %v438 = vadd.f32 %v291, %v437
      %v439 = vpop.f32.mrb[0].mxu0
      %440 = vdwg.mxu0
      %vm441 = vcmask 130048
      %442 = vst.msk [vmem:[%s201] sm:$0xff] %vm441, %v395
      %443 = vst.msk [vmem:[%s201 + $0x8] sm:$0xff] %vm441, %v398
      %444 = vst.msk [vmem:[%s201 + $0x10] sm:$0xff] %vm441, %v403
      %445 = vst.msk [vmem:[%s201 + $0x18] sm:$0xff] %vm441, %v406
      %446 = vst.msk [vmem:[%s201 + $0x20] sm:$0xff] %vm441, %v411
      %447 = vst.msk [vmem:[%s201 + $0x28] sm:$0xff] %vm441, %v414
      %448 = vst.msk [vmem:[%s201 + $0x30] sm:$0xff] %vm441, %v419
      %449 = vst.msk [vmem:[%s201 + $0x38] sm:$0xff] %vm441, %v422
      %450 = vst.msk [vmem:[%s201 + $0x40] sm:$0xff] %vm441, %v427
      %451 = vst.msk [vmem:[%s201 + $0x48] sm:$0xff] %vm441, %v430
      %452 = vst.msk [vmem:[%s201 + $0x50] sm:$0xff] %vm441, %v435
      %453 = vst.msk [vmem:[%s201 + $0x58] sm:$0xff] %vm441, %v438
      %p454 = scmp.lt.s32.totalorder %s18, 1
      %s455 = scalar_select %p454, %s18, 1
      %p456 = scmp.lt.s32.totalorder %s19, 0
      %s457 = scalar_select %p456, %s19, 0
      %s458 = smul.addr %s455, 12
      %s459 = sadd.s32 %s457, %s458
      %s460 = smul.addr %s459, 8
      %s461 = scalar_lea.vmem %s3, %s460
      // Predicated region
      $region33: #{patch_embed.1} parent=31 // pred_check
        %p462 = pneg %p116
      $region34: #{patch_embed.1} parent=31 // pred_check_branch
        %464 = sbr.rel (%p462) target = $region36
      $region35: #{patch_embed.1} parent=31 // pred_region
        _
      $region36: #{patch_embed.1} parent=31 // pred_fallthru
        _
    $region32: #{patch_embed.1} parent=5 // pred_fallthru
      _
    %p465 = scmp.le.s32.totalorder 2, %s9
    // Predicated region
    $region37: #{patch_embed.1} parent=5 // pred_check
      %p466 = pneg %p465
    $region38: #{patch_embed.1} parent=5 // pred_check_branch
      %468 = sbr.rel (%p466) target = $region40
    $region39: #{patch_embed.1} parent=5 // pred_region
      %s469 = ssub.s32 %s9, 2
      // Predicated region
      $region41: #{patch_embed.1} parent=39 // pred_check
        %p470 = pneg %p122
      $region42: #{patch_embed.1} parent=39 // pred_check_branch
        %472 = sbr.rel (%p470) target = $region44
      $region43: #{patch_embed.1} parent=39 // pred_region
        %p473 = scmp.lt.s32.totalorder %s20, 1
        %s474 = scalar_select %p473, %s20, 1
        %p475 = scmp.lt.s32.totalorder %s21, 0
        %s476 = scalar_select %p475, %s21, 0
        %s477 = smul.addr %s474, 12
        %s478 = sadd.s32 %s476, %s477
        %s479 = smul.addr %s478, 8
        %s480 = scalar_lea.vmem %s3, %s479
      $region44: #{patch_embed.1} parent=39 // pred_fallthru
        _
    $region40: #{patch_embed.1} parent=5 // pred_fallthru
      _
  $region6: #{patch_embed.1} parent=0 // loop_footer
    %s13 = sadd.s32 1, %s9
  $region7: #{patch_embed.1} parent=0 // loop_footer_branch
    %8 = sbr.rel target = $region3
  $region8: #{patch_embed.1} parent=0 // loop_exit
    _

</llo_original>
